<compile_context>
chip_gen: v7x
topology: tpu7x:2x2x1
jax: 0.10.0
libtpu: 0.0.40
codegen_flags: <defaults>
</compile_context>

<pallas_src>
import functools

import jax
import jax.numpy as jnp
from jax.experimental import pallas as pl
from jax.experimental.pallas import tpu as pltpu


def _conv_relu_norm_kernel(x_ref, halo_ref, w_ref, b_ref, g_ref, beta_ref, o_ref,
                           *, eps, k_taps):
    # x_ref:    (1, Cin, T_TILE)        current time tile (NCW, time on lanes)
    # halo_ref: (1, 1, Cin, HALO_W)     next K-1 (>=1) time columns after the tile
    # w_ref:    (K, Cout, Cin)          per-tap (Cout, Cin) matmul weights
    # b_ref:    (Cout, 1)               conv bias
    # g_ref:    (Cout, 1)               LayerNorm weight
    # beta_ref: (Cout, 1)               LayerNorm bias
    # o_ref:    (1, Cout, T_TILE)
    cout = o_ref.shape[1]
    t_tile = o_ref.shape[2]

    # Tile + halo along the lane (time) axis; native dtype, no upcast.
    x_cat = jnp.concatenate([x_ref[0], halo_ref[0, 0]], axis=-1)  # (Cin, T_TILE+HALO)

    # Conv as K shifted matmuls; f32 accumulator only.
    acc = jnp.zeros((cout, t_tile), dtype=jnp.float32)
    for k in range(k_taps):  # static unroll over taps
        acc += jnp.dot(w_ref[k], x_cat[:, k:k + t_tile],
                       preferred_element_type=jnp.float32)

    # Bias + ReLU.
    acc += b_ref[...].astype(jnp.float32)            # (Cout, 1) broadcast over time
    acc = jnp.maximum(acc, 0.0)

    # One-pass LayerNorm over the channel (sublane) axis, biased variance.
    inv_c = jnp.float32(1.0 / cout)
    s1 = jnp.sum(acc, axis=0, keepdims=True)         # (1, T_TILE)
    s2 = jnp.sum(acc * acc, axis=0, keepdims=True)   # (1, T_TILE)
    mean = s1 * inv_c
    var = jnp.maximum(s2 * inv_c - mean * mean, 0.0)
    inv_std = jax.lax.rsqrt(var + eps)
    out = (acc - mean) * inv_std
    out = out * g_ref[...].astype(jnp.float32) + beta_ref[...].astype(jnp.float32)

    o_ref[0] = out.astype(o_ref.dtype)


def conv_relu_norm(signal_ncw, conv_w, conv_b, ln_gamma, ln_beta,
                   *, eps=1e-5, time_tile_hint=512):
    """signal_ncw: (N, Cin, T); conv_w: (Cout, Cin, K); returns (N, Cout, T)."""
    N, Cin, T = signal_ncw.shape
    Cout, Cin_w, K = conv_w.shape
    assert Cin_w == Cin
    assert K % 2 == 1, "only odd kernel_size matches PyTorch padding=K//2 semantics"

    # Time tiling: full sequence if small, otherwise 128-aligned tiles
    # (lane-dense output stores).
    t_tile = T if T <= time_tile_hint else time_tile_hint
    nt = pl.cdiv(T, t_tile)
    t_round = nt * t_tile
    halo_w = max(K - 1, 1)

    # Zero-pad time once: K//2 'same' padding on the left, and enough on the
    # right for (a) conv 'same' padding, (b) rounding T up to nt*t_tile,
    # (c) the halo slab of the last tile.
    pad_l = K // 2
    total_len = t_round + halo_w
    x_full = jnp.pad(signal_ncw, ((0, 0), (0, 0), (pad_l, total_len - pad_l - T)))

    x_main = x_full[:, :, :t_round]                                   # (N, Cin, t_round)
    x_halo = jnp.stack(
        [x_full[:, :, (t + 1) * t_tile:(t + 1) * t_tile + halo_w] for t in range(nt)],
        axis=1)                                                        # (N, nt, Cin, halo_w)

    # (Cout, Cin, K) -> (K, Cout, Cin): each tap is a ready (Cout, Cin) matmul.
    w_koi = jnp.transpose(conv_w, (2, 0, 1))
    b2 = conv_b.reshape(Cout, 1)
    g2 = ln_gamma.reshape(Cout, 1)
    beta2 = ln_beta.reshape(Cout, 1)

    kernel = functools.partial(_conv_relu_norm_kernel, eps=eps, k_taps=K)

    out = pl.pallas_call(
        kernel,
        out_shape=jax.ShapeDtypeStruct((N, Cout, t_round), signal_ncw.dtype),
        grid_spec=pltpu.PrefetchScalarGridSpec(
            num_scalar_prefetch=0,
            grid=(N, nt),
            in_specs=[
                pl.BlockSpec((1, Cin, t_tile), lambda n, t: (n, 0, t)),
                pl.BlockSpec((1, 1, Cin, halo_w), lambda n, t: (n, t, 0, 0)),
                pl.BlockSpec((K, Cout, Cin), lambda n, t: (0, 0, 0)),
                pl.BlockSpec((Cout, 1), lambda n, t: (0, 0)),
                pl.BlockSpec((Cout, 1), lambda n, t: (0, 0)),
                pl.BlockSpec((Cout, 1), lambda n, t: (0, 0)),
            ],
            out_specs=pl.BlockSpec((1, Cout, t_tile), lambda n, t: (n, 0, t)),
        ),
        compiler_params=pltpu.CompilerParams(
            # Disjoint output blocks on both axes -> megacore-shardable.
            dimension_semantics=("parallel", "parallel"),
            # Tiles are sized to fit the default 32 MiB scoped VMEM on all chips
            # (v7x physical VMEM is only 64 MiB), so no vmem_limit override.
        ),
    )(x_main, x_halo, w_koi, b2, g2, beta2)

    return out[:, :, :T] if t_round != T else out


def _reference(signal_ncw, conv_w, conv_b, ln_gamma, ln_beta, eps=1e-5):
    """Pure-JAX reference of ConvReLUNorm.forward (dropout p=0, eval)."""
    K = conv_w.shape[-1]
    pad = K // 2
    y = jax.lax.conv_general_dilated(
        signal_ncw.astype(jnp.float32),
        conv_w.astype(jnp.float32),
        window_strides=(1,),
        padding=[(pad, pad)],
        dimension_numbers=("NCH", "OIH", "NCH"),
    ) + conv_b.astype(jnp.float32)[None, :, None]
    y = jnp.maximum(y, 0.0)
    y = jnp.transpose(y, (0, 2, 1))                       # (N, T, Cout)
    mean = jnp.mean(y, axis=-1, keepdims=True)
    var = jnp.mean((y - mean) ** 2, axis=-1, keepdims=True)
    y = (y - mean) * jax.lax.rsqrt(var + eps)
    y = y * ln_gamma + ln_beta
    return jnp.transpose(y, (0, 2, 1)).astype(signal_ncw.dtype)


if __name__ == "__main__":
    # Small shapes consistent with the module: Conv1d over (N, Cin, T).
    N, Cin, Cout, T, K = 2, 4, 8, 16, 3

    key = jax.random.PRNGKey(0)
    k_x, k_w, k_b = jax.random.split(key, 3)

    x = jax.random.normal(k_x, (N, Cin, T), dtype=jnp.float32)

    # Deterministic parameter init (Conv1d-style uniform fan-in scaling).
    fan_in = Cin * K
    bound = 1.0 / (fan_in ** 0.5)
    conv_w = jax.random.uniform(k_w, (Cout, Cin, K), jnp.float32, -bound, bound)
    conv_b = jax.random.uniform(k_b, (Cout,), jnp.float32, -bound, bound)
    # LayerNorm default init: weight=1, bias=0.
    ln_gamma = jnp.ones((Cout,), jnp.float32)
    ln_beta = jnp.zeros((Cout,), jnp.float32)

    out = conv_relu_norm(x, conv_w, conv_b, ln_gamma, ln_beta)
    out = jax.block_until_ready(out)

    ref = _reference(x, conv_w, conv_b, ln_gamma, ln_beta)
    assert out.shape == (N, Cout, T)
    assert jnp.allclose(out, ref, atol=1e-2, rtol=1e-2), "mismatch vs reference"

    print("KERNEL_OK")
</pallas_src>

<mosaic_0001>
module attributes {stable_mosaic.version = 11 : i64} {
  func.func @_conv_relu_norm_kernel(%arg0: i32, %arg1: i32, %arg2: memref<1x4x16xf32, #tpu.memory_space<vmem>>, %arg3: memref<1x1x4x2xf32, #tpu.memory_space<vmem>>, %arg4: memref<3x8x4xf32, #tpu.memory_space<vmem>>, %arg5: memref<8x1xf32, #tpu.memory_space<vmem>>, %arg6: memref<8x1xf32, #tpu.memory_space<vmem>>, %arg7: memref<8x1xf32, #tpu.memory_space<vmem>>, %arg8: memref<1x8x16xf32, #tpu.memory_space<vmem>>) attributes {dimension_semantics = [#tpu.dimension_semantics<parallel>, #tpu.dimension_semantics<parallel>], iteration_bounds = array<i64: 2, 1>, scalar_prefetch = 0 : i64, scratch_operands = 0 : i64, tpu.core_type = #tpu.core_type<tc>, window_params = [{transform_indices = @transform_0, window_bounds = array<i64: 1, 4, 16>}, {transform_indices = @transform_1, window_bounds = array<i64: 1, 1, 4, 2>}, {pipeline_mode = #tpu.pipeline_mode<synchronous>, transform_indices = @transform_2, window_bounds = array<i64: 3, 8, 4>}, {pipeline_mode = #tpu.pipeline_mode<synchronous>, transform_indices = @transform_3, window_bounds = array<i64: 8, 1>}, {pipeline_mode = #tpu.pipeline_mode<synchronous>, transform_indices = @transform_4, window_bounds = array<i64: 8, 1>}, {pipeline_mode = #tpu.pipeline_mode<synchronous>, transform_indices = @transform_5, window_bounds = array<i64: 8, 1>}, {transform_indices = @transform_6, window_bounds = array<i64: 1, 8, 16>}]} {
    %c0 = arith.constant 0 : index
    %c0_0 = arith.constant 0 : index
    %c0_1 = arith.constant 0 : index
    %0 = vector.load %arg2[%c0, %c0_0, %c0_1] : memref<1x4x16xf32, #tpu.memory_space<vmem>>, vector<1x4x16xf32>
    %1 = vector.shape_cast %0 : vector<1x4x16xf32> to vector<4x16xf32>
    %c0_2 = arith.constant 0 : index
    %c0_3 = arith.constant 0 : index
    %c0_4 = arith.constant 0 : index
    %c0_5 = arith.constant 0 : index
    %2 = vector.load %arg3[%c0_2, %c0_3, %c0_4, %c0_5] : memref<1x1x4x2xf32, #tpu.memory_space<vmem>>, vector<1x1x4x2xf32>
    %3 = vector.shape_cast %2 : vector<1x1x4x2xf32> to vector<4x2xf32>
    %4 = tpu.concatenate %1, %3 in 1 : vector<4x16xf32>, vector<4x2xf32> -> vector<4x18xf32>
    %cst = arith.constant 0.000000e+00 : f32
    %5 = vector.broadcast %cst : f32 to vector<8x16xf32>
    %c0_6 = arith.constant 0 : index
    %c0_7 = arith.constant 0 : index
    %c0_8 = arith.constant 0 : index
    %6 = vector.load %arg4[%c0_6, %c0_7, %c0_8] : memref<3x8x4xf32, #tpu.memory_space<vmem>>, vector<1x8x4xf32>
    %7 = vector.shape_cast %6 : vector<1x8x4xf32> to vector<8x4xf32>
    %8 = vector.extract_strided_slice %4 {offsets = [0, 0], sizes = [4, 16], strides = [1, 1]} : vector<4x18xf32> to vector<4x16xf32>
    %cst_9 = arith.constant dense<0.000000e+00> : vector<8x16xf32>
    %9 = tpu.matmul %7, %8, %cst_9 {dimension_numbers = #tpu.dot_dimension_numbers<[1], [0], [0], [1], [0, 0, 1, 1], [], []>} : vector<8x4xf32>, vector<4x16xf32>, vector<8x16xf32> -> vector<8x16xf32>
    %10 = arith.addf %5, %9 : vector<8x16xf32>
    %c1 = arith.constant 1 : index
    %c0_10 = arith.constant 0 : index
    %c0_11 = arith.constant 0 : index
    %11 = vector.load %arg4[%c1, %c0_10, %c0_11] : memref<3x8x4xf32, #tpu.memory_space<vmem>>, vector<1x8x4xf32>
    %12 = vector.shape_cast %11 : vector<1x8x4xf32> to vector<8x4xf32>
    %13 = vector.extract_strided_slice %4 {offsets = [0, 1], sizes = [4, 16], strides = [1, 1]} : vector<4x18xf32> to vector<4x16xf32>
    %cst_12 = arith.constant dense<0.000000e+00> : vector<8x16xf32>
    %14 = tpu.matmul %12, %13, %cst_12 {dimension_numbers = #tpu.dot_dimension_numbers<[1], [0], [0], [1], [0, 0, 1, 1], [], []>} : vector<8x4xf32>, vector<4x16xf32>, vector<8x16xf32> -> vector<8x16xf32>
    %15 = arith.addf %10, %14 : vector<8x16xf32>
    %c2 = arith.constant 2 : index
    %c0_13 = arith.constant 0 : index
    %c0_14 = arith.constant 0 : index
    %16 = vector.load %arg4[%c2, %c0_13, %c0_14] : memref<3x8x4xf32, #tpu.memory_space<vmem>>, vector<1x8x4xf32>
    %17 = vector.shape_cast %16 : vector<1x8x4xf32> to vector<8x4xf32>
    %18 = vector.extract_strided_slice %4 {offsets = [0, 2], sizes = [4, 16], strides = [1, 1]} : vector<4x18xf32> to vector<4x16xf32>
    %cst_15 = arith.constant dense<0.000000e+00> : vector<8x16xf32>
    %19 = tpu.matmul %17, %18, %cst_15 {dimension_numbers = #tpu.dot_dimension_numbers<[1], [0], [0], [1], [0, 0, 1, 1], [], []>} : vector<8x4xf32>, vector<4x16xf32>, vector<8x16xf32> -> vector<8x16xf32>
    %20 = arith.addf %15, %19 : vector<8x16xf32>
    %c0_16 = arith.constant 0 : index
    %c0_17 = arith.constant 0 : index
    %21 = vector.load %arg5[%c0_16, %c0_17] : memref<8x1xf32, #tpu.memory_space<vmem>>, vector<8x1xf32>
    %22 = vector.broadcast %21 : vector<8x1xf32> to vector<8x16xf32>
    %23 = arith.addf %20, %22 : vector<8x16xf32>
    %cst_18 = arith.constant 0.000000e+00 : f32
    %24 = vector.broadcast %cst_18 : f32 to vector<8x16xf32>
    %25 = arith.maximumf %23, %24 : vector<8x16xf32>
    %cst_19 = arith.constant dense<0.000000e+00> : vector<16xf32>
    %26 = vector.multi_reduction <add>, %25, %cst_19 [0] : vector<8x16xf32> to vector<16xf32>
    %27 = vector.shape_cast %26 : vector<16xf32> to vector<1x16xf32>
    %28 = arith.mulf %25, %25 : vector<8x16xf32>
    %cst_20 = arith.constant dense<0.000000e+00> : vector<16xf32>
    %29 = vector.multi_reduction <add>, %28, %cst_20 [0] : vector<8x16xf32> to vector<16xf32>
    %30 = vector.shape_cast %29 : vector<16xf32> to vector<1x16xf32>
    %cst_21 = arith.constant 1.250000e-01 : f32
    %31 = vector.broadcast %cst_21 : f32 to vector<1x16xf32>
    %32 = arith.mulf %27, %31 : vector<1x16xf32>
    %cst_22 = arith.constant 1.250000e-01 : f32
    %33 = vector.broadcast %cst_22 : f32 to vector<1x16xf32>
    %34 = arith.mulf %30, %33 : vector<1x16xf32>
    %35 = arith.mulf %32, %32 : vector<1x16xf32>
    %36 = arith.subf %34, %35 : vector<1x16xf32>
    %cst_23 = arith.constant 0.000000e+00 : f32
    %37 = vector.broadcast %cst_23 : f32 to vector<1x16xf32>
    %38 = arith.maximumf %36, %37 : vector<1x16xf32>
    %cst_24 = arith.constant 9.99999974E-6 : f32
    %39 = vector.broadcast %cst_24 : f32 to vector<1x16xf32>
    %40 = arith.addf %38, %39 : vector<1x16xf32>
    %41 = math.rsqrt %40 : vector<1x16xf32>
    %42 = vector.broadcast %32 : vector<1x16xf32> to vector<8x16xf32>
    %43 = arith.subf %25, %42 : vector<8x16xf32>
    %44 = vector.broadcast %41 : vector<1x16xf32> to vector<8x16xf32>
    %45 = arith.mulf %43, %44 : vector<8x16xf32>
    %c0_25 = arith.constant 0 : index
    %c0_26 = arith.constant 0 : index
    %46 = vector.load %arg6[%c0_25, %c0_26] : memref<8x1xf32, #tpu.memory_space<vmem>>, vector<8x1xf32>
    %47 = vector.broadcast %46 : vector<8x1xf32> to vector<8x16xf32>
    %48 = arith.mulf %45, %47 : vector<8x16xf32>
    %c0_27 = arith.constant 0 : index
    %c0_28 = arith.constant 0 : index
    %49 = vector.load %arg7[%c0_27, %c0_28] : memref<8x1xf32, #tpu.memory_space<vmem>>, vector<8x1xf32>
    %50 = vector.broadcast %49 : vector<8x1xf32> to vector<8x16xf32>
    %51 = arith.addf %48, %50 : vector<8x16xf32>
    %c0_29 = arith.constant 0 : index
    %c0_30 = arith.constant 0 : index
    %c0_31 = arith.constant 0 : index
    %52 = vector.load %arg8[%c0_29, %c0_30, %c0_31] : memref<1x8x16xf32, #tpu.memory_space<vmem>>, vector<1x8x16xf32>
    %53 = vector.shape_cast %52 : vector<1x8x16xf32> to vector<8x16xf32>
    %54 = vector.shape_cast %51 : vector<8x16xf32> to vector<1x8x16xf32>
    tpu.vector_store %arg8[%c0_29, %c0_30, %c0_31], %54 {strides = array<i32>} : memref<1x8x16xf32, #tpu.memory_space<vmem>>, vector<1x8x16xf32>,
    return
  }
  func.func @transform_0(%arg0: i32, %arg1: i32) -> (i32, i32, i32) {
    %c0_i32 = arith.constant 0 : i32
    %c0_i32_0 = arith.constant 0 : i32
    return %arg0, %c0_i32, %arg1 : i32, i32, i32
  }
  func.func @transform_1(%arg0: i32, %arg1: i32) -> (i32, i32, i32, i32) {
    %c0_i32 = arith.constant 0 : i32
    %c0_i32_0 = arith.constant 0 : i32
    %c0_i32_1 = arith.constant 0 : i32
    return %arg0, %arg1, %c0_i32, %c0_i32_0 : i32, i32, i32, i32
  }
  func.func @transform_2(%arg0: i32, %arg1: i32) -> (i32, i32, i32) {
    %c0_i32 = arith.constant 0 : i32
    %c0_i32_0 = arith.constant 0 : i32
    %c0_i32_1 = arith.constant 0 : i32
    %c0_i32_2 = arith.constant 0 : i32
    return %c0_i32, %c0_i32_0, %c0_i32_1 : i32, i32, i32
  }
  func.func @transform_3(%arg0: i32, %arg1: i32) -> (i32, i32) {
    %c0_i32 = arith.constant 0 : i32
    %c0_i32_0 = arith.constant 0 : i32
    %c0_i32_1 = arith.constant 0 : i32
    return %c0_i32, %c0_i32_0 : i32, i32
  }
  func.func @transform_4(%arg0: i32, %arg1: i32) -> (i32, i32) {
    %c0_i32 = arith.constant 0 : i32
    %c0_i32_0 = arith.constant 0 : i32
    %c0_i32_1 = arith.constant 0 : i32
    return %c0_i32, %c0_i32_0 : i32, i32
  }
  func.func @transform_5(%arg0: i32, %arg1: i32) -> (i32, i32) {
    %c0_i32 = arith.constant 0 : i32
    %c0_i32_0 = arith.constant 0 : i32
    %c0_i32_1 = arith.constant 0 : i32
    return %c0_i32, %c0_i32_0 : i32, i32
  }
  func.func @transform_6(%arg0: i32, %arg1: i32) -> (i32, i32, i32) {
    %c0_i32 = arith.constant 0 : i32
    %c0_i32_0 = arith.constant 0 : i32
    return %arg0, %c0_i32, %arg1 : i32, i32, i32
  }
}

</mosaic_0001>

<llo_original>
// kernel: tpu_custom_call.1
$region0: #{tpu_custom_call.1}
  #allocation0 [shape = 'u32[]', space=smem, size = 0x4, offset = 0x4, fixed_abs, tag = 'smem constant byte address 0x4 - core index']
  #allocation1 [shape = 'u32[144,128]{1,0:T(1,128)}', space=vmem, size = 0x12000, scoped, tag = 'internal scratch']
  %s0 = inlined_call_operand.vmem [shape: f32[2,4,16], index: 0, kind: input, shape index: {}]
  %s1 = inlined_call_operand.vmem [shape: f32[2,1,4,2], index: 1, kind: input, shape index: {}]
  %s2 = inlined_call_operand.vmem [shape: f32[3,8,4], index: 2, kind: input, shape index: {}]
  %s3 = inlined_call_operand.vmem [shape: f32[8,1], index: 3, kind: input, shape index: {}]
  %s4 = inlined_call_operand.vmem [shape: f32[8,1], index: 4, kind: input, shape index: {}]
  %s5 = inlined_call_operand.vmem [shape: f32[8,1], index: 5, kind: input, shape index: {}]
  %s6 = inlined_call_operand.hbm [shape: f32[2,8,16], index: 6, kind: output, shape index: {}]
  %s7 = sld [smem:[#allocation0]]
  $region57: #{tpu_custom_call.1} parent=0
    _
  %s9 = ssub.s32 1, %s7
  %s10 = scalar_select 0, %s9, %s7
  $region1: #{tpu_custom_call.1} parent=0
    #allocation2 [shape = 'u8[8192]{0}', space=vmem, size = 0x2000, scoped, tag = 'output window, operand 0']
    #allocation3 [shape = 's32[2]{0}', space=sflag, size = 0x8, scoped, tag = 'scoped memory for tpu_custom_call.1']
    %11 = vsyncpa [#allocation3], 0
    %s12 = scalar_lea.sflag [#allocation3], 1
    %13 = vsyncpa %s12, 0
    loop: start=0, step=1, limit=4
    $region2: #{tpu_custom_call.1} parent=1 // loop_pre_header
      _
    $region3: #{tpu_custom_call.1} parent=1 // loop_header
      %s15 = sphi 0, %s19
      %p16 = scmp.ge.s32.totalorder %s15, 4
      %s22 = sphi 0, %s34
      %s23 = sphi 0, %s30
      %s24 = sphi 0, %s22
      %s25 = sphi 0, %s23
      %s26 = sphi 0, %s24
      %s27 = sphi 0, %s25
      %s39 = sphi 0, %s41
      %s42 = sphi 0, %s39
      %s43 = sphi 0, %s42
      %s59 = sphi 0, %s43
      %s67 = sphi 0, %s69
      %s70 = sphi 0, %s67
      %s71 = sphi 0, %s70
      %s87 = sphi 0, %s71
      %s91 = sphi 0, %s91
      %s93 = sphi 0, %s91
      %s94 = sphi 0, %s93
      %s108 = sphi 0, %s94
      %s112 = sphi 0, %s112
      %s114 = sphi 0, %s112
      %s115 = sphi 0, %s114
      %s129 = sphi 0, %s115
      %s133 = sphi 0, %s133
      %s135 = sphi 0, %s133
      %s136 = sphi 0, %s135
      %s150 = sphi 0, %s136
      %s154 = sphi 0, %s154
      %s156 = sphi 0, %s154
      %s157 = sphi 0, %s156
      %s171 = sphi 0, %s157
      %s179 = sphi 0, %s181
      %s182 = sphi 0, %s179
      %s183 = sphi 0, %s182
      %s199 = sphi 0, %s183
    $region4: #{tpu_custom_call.1} parent=1 // loop_header_branch
      %18 = sbr.rel (%p16) target = $region8
    $region5: #{tpu_custom_call.1} parent=1 // loop_body
      %s20 = ssub.s32 %s15, 1
      %s21 = ssub.s32 %s15, 2
      %s28 = sadd.s32 1, %s23
      %p29 = scmp.ge.s32.totalorder %s28, 1
      %s30 = scalar_select %p29, 0, %s28
      %s31 = sadd.s32 1, %s22
      %s32 = scalar_select %p29, %s31, %s22
      %p33 = scmp.ge.s32.totalorder %s32, 2
      %s34 = scalar_select %p33, 0, %s32
      %s35 = ssub.s32 %s22, %s34
      %s36 = ssub.s32 %s23, %s30
      %s37 = sor.u32 %s35, %s36
      %p38 = scmp.eq.s32.totalorder %s37, 0
      %s40 = sadd.s32 %s39, 1
      %s41 = scalar_select %p38, %s39, %s40
      %p44 = pneg %p38
      %p45 = scmp.eq.s32.totalorder %s15, 1
      %p46 = por %p44, %p45
      %p47 = scmp.ne.s32.totalorder %s39, %s42
      %p48 = scmp.eq.s32.totalorder %s15, 0
      %p49 = por %p47, %p48
      %p50 = scmp.ne.s32.totalorder %s39, %s42
      %p51 = scmp.eq.s32.totalorder %s20, 1
      %p52 = por %p50, %p51
      %p53 = scmp.ne.s32.totalorder %s42, %s43
      %p54 = scmp.eq.s32.totalorder %s20, 0
      %p55 = por %p53, %p54
      %p56 = scmp.ne.s32.totalorder %s42, %s43
      %p57 = scmp.eq.s32.totalorder %s21, 1
      %p58 = por %p56, %p57
      %p60 = scmp.ne.s32.totalorder %s43, %s59
      %p61 = scmp.eq.s32.totalorder %s21, 0
      %p62 = por %p60, %p61
      %s63 = ssub.s32 %s22, %s34
      %s64 = ssub.s32 %s23, %s30
      %s65 = sor.u32 %s63, %s64
      %p66 = scmp.eq.s32.totalorder %s65, 0
      %s68 = sadd.s32 %s67, 1
      %s69 = scalar_select %p66, %s67, %s68
      %p72 = pneg %p66
      %p73 = scmp.eq.s32.totalorder %s15, 1
      %p74 = por %p72, %p73
      %p75 = scmp.ne.s32.totalorder %s67, %s70
      %p76 = scmp.eq.s32.totalorder %s15, 0
      %p77 = por %p75, %p76
      %p78 = scmp.ne.s32.totalorder %s67, %s70
      %p79 = scmp.eq.s32.totalorder %s20, 1
      %p80 = por %p78, %p79
      %p81 = scmp.ne.s32.totalorder %s70, %s71
      %p82 = scmp.eq.s32.totalorder %s20, 0
      %p83 = por %p81, %p82
      %p84 = scmp.ne.s32.totalorder %s70, %s71
      %p85 = scmp.eq.s32.totalorder %s21, 1
      %p86 = por %p84, %p85
      %p88 = scmp.ne.s32.totalorder %s71, %s87
      %p89 = scmp.eq.s32.totalorder %s21, 0
      %p90 = por %p88, %p89
      %s92 = sadd.s32 %s91, 1
      %p95 = scmp.eq.s32.totalorder %s15, 1
      %p96 = scmp.ne.s32.totalorder %s91, %s93
      %p97 = scmp.eq.s32.totalorder %s15, 0
      %p98 = por %p96, %p97
      %p99 = scmp.ne.s32.totalorder %s91, %s93
      %p100 = scmp.eq.s32.totalorder %s20, 1
      %p101 = por %p99, %p100
      %p102 = scmp.ne.s32.totalorder %s93, %s94
      %p103 = scmp.eq.s32.totalorder %s20, 0
      %p104 = por %p102, %p103
      %p105 = scmp.ne.s32.totalorder %s93, %s94
      %p106 = scmp.eq.s32.totalorder %s21, 1
      %p107 = por %p105, %p106
      %p109 = scmp.ne.s32.totalorder %s94, %s108
      %p110 = scmp.eq.s32.totalorder %s21, 0
      %p111 = por %p109, %p110
      %s113 = sadd.s32 %s112, 1
      %p116 = scmp.eq.s32.totalorder %s15, 1
      %p117 = scmp.ne.s32.totalorder %s112, %s114
      %p118 = scmp.eq.s32.totalorder %s15, 0
      %p119 = por %p117, %p118
      %p120 = scmp.ne.s32.totalorder %s112, %s114
      %p121 = scmp.eq.s32.totalorder %s20, 1
      %p122 = por %p120, %p121
      %p123 = scmp.ne.s32.totalorder %s114, %s115
      %p124 = scmp.eq.s32.totalorder %s20, 0
      %p125 = por %p123, %p124
      %p126 = scmp.ne.s32.totalorder %s114, %s115
      %p127 = scmp.eq.s32.totalorder %s21, 1
      %p128 = por %p126, %p127
      %p130 = scmp.ne.s32.totalorder %s115, %s129
      %p131 = scmp.eq.s32.totalorder %s21, 0
      %p132 = por %p130, %p131
      %s134 = sadd.s32 %s133, 1
      %p137 = scmp.eq.s32.totalorder %s15, 1
      %p138 = scmp.ne.s32.totalorder %s133, %s135
      %p139 = scmp.eq.s32.totalorder %s15, 0
      %p140 = por %p138, %p139
      %p141 = scmp.ne.s32.totalorder %s133, %s135
      %p142 = scmp.eq.s32.totalorder %s20, 1
      %p143 = por %p141, %p142
      %p144 = scmp.ne.s32.totalorder %s135, %s136
      %p145 = scmp.eq.s32.totalorder %s20, 0
      %p146 = por %p144, %p145
      %p147 = scmp.ne.s32.totalorder %s135, %s136
      %p148 = scmp.eq.s32.totalorder %s21, 1
      %p149 = por %p147, %p148
      %p151 = scmp.ne.s32.totalorder %s136, %s150
      %p152 = scmp.eq.s32.totalorder %s21, 0
      %p153 = por %p151, %p152
      %s155 = sadd.s32 %s154, 1
      %p158 = scmp.eq.s32.totalorder %s15, 1
      %p159 = scmp.ne.s32.totalorder %s154, %s156
      %p160 = scmp.eq.s32.totalorder %s15, 0
      %p161 = por %p159, %p160
      %p162 = scmp.ne.s32.totalorder %s154, %s156
      %p163 = scmp.eq.s32.totalorder %s20, 1
      %p164 = por %p162, %p163
      %p165 = scmp.ne.s32.totalorder %s156, %s157
      %p166 = scmp.eq.s32.totalorder %s20, 0
      %p167 = por %p165, %p166
      %p168 = scmp.ne.s32.totalorder %s156, %s157
      %p169 = scmp.eq.s32.totalorder %s21, 1
      %p170 = por %p168, %p169
      %p172 = scmp.ne.s32.totalorder %s157, %s171
      %p173 = scmp.eq.s32.totalorder %s21, 0
      %p174 = por %p172, %p173
      %s175 = ssub.s32 %s22, %s34
      %s176 = ssub.s32 %s23, %s30
      %s177 = sor.u32 %s175, %s176
      %p178 = scmp.eq.s32.totalorder %s177, 0
      %s180 = sadd.s32 %s179, 1
      %s181 = scalar_select %p178, %s179, %s180
      %p184 = pneg %p178
      %p185 = scmp.eq.s32.totalorder %s15, 1
      %p186 = por %p184, %p185
      %p187 = scmp.ne.s32.totalorder %s179, %s182
      %p188 = scmp.eq.s32.totalorder %s15, 0
      %p189 = por %p187, %p188
      %p190 = scmp.ne.s32.totalorder %s179, %s182
      %p191 = scmp.eq.s32.totalorder %s20, 1
      %p192 = por %p190, %p191
      %p193 = scmp.ne.s32.totalorder %s182, %s183
      %p194 = scmp.eq.s32.totalorder %s20, 0
      %p195 = por %p193, %p194
      %p196 = scmp.ne.s32.totalorder %s182, %s183
      %p197 = scmp.eq.s32.totalorder %s21, 1
      %p198 = por %p196, %p197
      %p200 = scmp.ne.s32.totalorder %s183, %s199
      %p201 = scmp.eq.s32.totalorder %s21, 0
      %p202 = por %p200, %p201
      %p203 = scmp.le.s32.totalorder 1, %s15
      %p204 = scmp.lt.s32.totalorder %s15, 3
      %p205 = pnand %p203, %p204
      %p206 = pneg %p205
      // Predicated region
      $region9: #{tpu_custom_call.1} parent=5 // pred_check
        _
      $region10: #{tpu_custom_call.1} parent=5 // pred_check_branch
        %208 = sbr.rel (%p205) target = $region12
      $region11: #{tpu_custom_call.1} parent=5 // pred_region
        %s209 = ssub.s32 %s15, 1
        // Predicated region
        $region13: #{tpu_custom_call.1} parent=11 // pred_check
          %p210 = pneg %p104
        $region14: #{tpu_custom_call.1} parent=11 // pred_check_branch
          %212 = sbr.rel (%p210) target = $region16
        $region15: #{tpu_custom_call.1} parent=11 // pred_region
          _
        $region16: #{tpu_custom_call.1} parent=11 // pred_fallthru
          _
        // Predicated region
        $region17: #{tpu_custom_call.1} parent=11 // pred_check
          %p213 = pneg %p125
        $region18: #{tpu_custom_call.1} parent=11 // pred_check_branch
          %215 = sbr.rel (%p213) target = $region20
        $region19: #{tpu_custom_call.1} parent=11 // pred_region
          _
        $region20: #{tpu_custom_call.1} parent=11 // pred_fallthru
          _
        // Predicated region
        $region21: #{tpu_custom_call.1} parent=11 // pred_check
          %p216 = pneg %p146
        $region22: #{tpu_custom_call.1} parent=11 // pred_check_branch
          %218 = sbr.rel (%p216) target = $region24
        $region23: #{tpu_custom_call.1} parent=11 // pred_region
          _
        $region24: #{tpu_custom_call.1} parent=11 // pred_fallthru
          _
        // Predicated region
        $region25: #{tpu_custom_call.1} parent=11 // pred_check
          %p219 = pneg %p167
        $region26: #{tpu_custom_call.1} parent=11 // pred_check_branch
          %221 = sbr.rel (%p219) target = $region28
        $region27: #{tpu_custom_call.1} parent=11 // pred_region
          _
        $region28: #{tpu_custom_call.1} parent=11 // pred_fallthru
          _
      $region12: #{tpu_custom_call.1} parent=5 // pred_fallthru
        _
      %p222 = scmp.lt.s32.totalorder %s15, 2
      // Predicated region
      $region29: #{tpu_custom_call.1} parent=5 // pred_check
        %p223 = pneg %p222
      $region30: #{tpu_custom_call.1} parent=5 // pred_check_branch
        %225 = sbr.rel (%p223) target = $region32
      $region31: #{tpu_custom_call.1} parent=5 // pred_region
        // Predicated region
        $region33: #{tpu_custom_call.1} parent=31 // pred_check
          %p226 = pneg %p49
        $region34: #{tpu_custom_call.1} parent=31 // pred_check_branch
          %228 = sbr.rel (%p226) target = $region36
        $region35: #{tpu_custom_call.1} parent=31 // pred_region
          %p229 = scmp.lt.s32.totalorder %s22, 1
          %s230 = scalar_select %p229, %s22, 1
          %p231 = scmp.lt.s32.totalorder %s23, 0
          %s232 = scalar_select %p231, %s23, 0
          %s233 = sadd.s32 %s232, %s230
          %s234 = smul.addr %s233, 4
          %s235 = scalar_lea.vmem %s0, %s234
        $region36: #{tpu_custom_call.1} parent=31 // pred_fallthru
          _
        // Predicated region
        $region37: #{tpu_custom_call.1} parent=31 // pred_check
          %p236 = pneg %p77
        $region38: #{tpu_custom_call.1} parent=31 // pred_check_branch
          %238 = sbr.rel (%p236) target = $region40
        $region39: #{tpu_custom_call.1} parent=31 // pred_region
          %p239 = scmp.lt.s32.totalorder %s22, 1
          %s240 = scalar_select %p239, %s22, 1
          %p241 = scmp.lt.s32.totalorder %s23, 0
          %s242 = scalar_select %p241, %s23, 0
          %s243 = sadd.s32 %s242, %s240
          %s244 = smul.addr %s243, 4
          %s245 = scalar_lea.vmem %s1, %s244
        $region40: #{tpu_custom_call.1} parent=31 // pred_fallthru
          _
      $region32: #{tpu_custom_call.1} parent=5 // pred_fallthru
        _
      %p246 = scmp.le.s32.totalorder 1, %s15
      %p247 = scmp.lt.s32.totalorder %s15, 3
      %p248 = pnand %p246, %p247
      %p249 = pneg %p248
      // Predicated region
      $region41: #{tpu_custom_call.1} parent=5 // pred_check
        _
      $region42: #{tpu_custom_call.1} parent=5 // pred_check_branch
        %251 = sbr.rel (%p248) target = $region44
      $region43: #{tpu_custom_call.1} parent=5 // pred_region
        %s252 = ssub.s32 %s15, 1
        %p253 = scmp.lt.s32.totalorder %s24, 1
        %s254 = scalar_select %p253, %s24, 1
        %p255 = scmp.lt.s32.totalorder %s25, 0
        %s256 = scalar_select %p255, %s25, 0
        %s257 = sadd.s32 %s256, %s254
        %s258 = smul.addr %s257, 4
        %s259 = scalar_lea.vmem %s0, %s258
        %p260 = pneg %p55
        %p261 = pneg %p52
        %p262 = scmp.lt.s32.totalorder %s24, 1
        %s263 = scalar_select %p262, %s24, 1
        %p264 = scmp.lt.s32.totalorder %s25, 0
        %s265 = scalar_select %p264, %s25, 0
        %s266 = sadd.s32 %s265, %s263
        %s267 = smul.addr %s266, 4
        %s268 = scalar_lea.vmem %s1, %s267
        %p269 = pneg %p83
        %p270 = pneg %p80
        %p271 = pneg %p104
        %p272 = pneg %p101
        %p273 = pneg %p125
        %p274 = pneg %p122
        %p275 = pneg %p146
        %p276 = pneg %p143
        %p277 = pneg %p167
        %p278 = pneg %p164
        %p279 = pneg %p195
        %p280 = pneg %p192
        %s281 = sand.u32 %s182, 1
        %s282 = scalar_lea.sflag [#allocation3], %s281
        %s283 = sand.u32 %s182, 1
        %s284 = smul.addr %s283, 8
        %s285 = scalar_lea.vmem [#allocation2], %s284
        %p286 = scmp.lt.s32.totalorder %s24, 1
        %s287 = scalar_select %p286, %s24, 1
        %p288 = scmp.lt.s32.totalorder %s25, 0
        %s289 = scalar_select %p288, %s25, 0
        %s290 = sadd.s32 %s289, %s287
        %s291 = smul.addr %s290, 4
        %s292 = scalar_lea.vmem %s0, %s291
        %p293 = scmp.lt.s32.totalorder %s24, 1
        %s294 = scalar_select %p293, %s24, 1
        %p295 = scmp.lt.s32.totalorder %s25, 0
        %s296 = scalar_select %p295, %s25, 0
        %s297 = sadd.s32 %s296, %s294
        %s298 = smul.addr %s297, 4
        %s299 = scalar_lea.vmem %s1, %s298
        %v300 = vld [vmem:[%s292] sm:$0xf]
        %v301 = vld [vmem:[%s299] sm:$0xf]
        %303 = vrot.lane.b32.xlu0 %v301, 16
        %v304 = vpop.permute.xlu0 %303
        %vm306 = vcmask 130048
        %v307 = vsel %vm306, %v300, %v304
        %v308 = vld [vmem:[%s2] sm:$0xff]
        %s309 = scalar_lea.vmem %s2, 8
        %v310 = vld [vmem:[%s309] sm:$0xff]
        %312 = vrot.lane.b32.xlu0 %v307, 127
        %v313 = vpop.permute.xlu0 %312
        %vm314 = vcmask 31744
        %v316 = vsel %vm314, %v310, 0
        %vm318 = vcmask 1043456
        %v319 = vsel %vm318, %v313, 0
        %321 = vmatprep.subr.mxu0 0.0
        %322 = vmatpush1.msra.mxu0 %v319
        %323 = vmatprep.subr.mxu0 0.0
        %324 = vmatpush1.msra.mxu0 0.0
        %325 = vmatprep.subr.mxu0 0.0
        %326 = vmatpush1.msra.mxu0 0.0
        %327 = vmatprep.subr.mxu0 0.0
        %328 = vmatpush1.msra.mxu0 0.0
        %329 = vmatprep.subr.mxu0 0.0
        %330 = vmatpush1.msra.mxu0 0.0
        %331 = vmatprep.subr.mxu0 0.0
        %332 = vmatpush1.msra.mxu0 0.0
        %333 = vmatprep.subr.mxu0 0.0
        %334 = vmatpush1.msra.mxu0 0.0
        %335 = vmatprep.subr.mxu0 0.0
        %336 = vmatpush1.msra.mxu0 0.0
        %337 = vmatprep.subr.mxu0 0.0
        %338 = vmatpush1.msra.mxu0 0.0
        %339 = vmatprep.subr.mxu0 0.0
        %340 = vmatpush1.msra.mxu0 0.0
        %341 = vmatprep.subr.mxu0 0.0
        %342 = vmatpush1.msra.mxu0 0.0
        %343 = vmatprep.subr.mxu0 0.0
        %344 = vmatpush1.msra.mxu0 0.0
        %345 = vmatprep.subr.mxu0 0.0
        %346 = vmatpush1.msra.mxu0 0.0
        %347 = vmatprep.subr.mxu0 0.0
        %348 = vmatpush1.msra.mxu0 0.0
        %349 = vmatprep.subr.mxu0 0.0
        %350 = vmatpush1.msra.mxu0 0.0
        %351 = vmatprep.subr.mxu0 0.0
        %352 = vmatpush1.msra.mxu0 0.0
        %353 = vmatprep.subr.mxu0 0.0
        %354 = vmatpush1.msra.mxu0 0.0
        %355 = vmatprep.subr.mxu0 0.0
        %356 = vmatpush1.msra.mxu0 0.0
        %357 = vmatprep.subr.mxu0 0.0
        %358 = vmatpush1.msra.mxu0 0.0
        %359 = vmatprep.subr.mxu0 0.0
        %360 = vmatpush1.msra.mxu0 0.0
        %361 = vmatprep.subr.mxu0 0.0
        %362 = vmatpush1.msra.mxu0 0.0
        %363 = vmatprep.subr.mxu0 0.0
        %364 = vmatpush1.msra.mxu0 0.0
        %365 = vmatprep.subr.mxu0 0.0
        %366 = vmatpush1.msra.mxu0 0.0
        %367 = vmatprep.subr.mxu0 0.0
        %368 = vmatpush1.msra.mxu0 0.0
        %369 = vmatprep.subr.mxu0 0.0
        %370 = vmatpush1.msra.mxu0 0.0
        %371 = vmatprep.subr.mxu0 0.0
        %372 = vmatpush1.msra.mxu0 0.0
        %373 = vmatprep.subr.mxu0 0.0
        %374 = vmatpush1.msra.mxu0 0.0
        %375 = vmatprep.subr.mxu0 0.0
        %376 = vmatpush1.msra.mxu0 0.0
        %377 = vmatprep.subr.mxu0 0.0
        %378 = vmatpush1.msra.mxu0 0.0
        %379 = vmatprep.subr.mxu0 0.0
        %380 = vmatpush1.msra.mxu0 0.0
        %381 = vmatprep.subr.mxu0 0.0
        %382 = vmatpush1.msra.mxu0 0.0
        %383 = vmatprep.subr.mxu0 0.0
        %384 = vmatpush1.msra.mxu0 0.0
        %385 = vmatprep.mubr.f32.mxu0 0.0
        %386 = vmatmul.mubr.f32.gmra.mrb[0].mxu0 %v316
        %v387 = vpop.f32.mrb[0].mxu0
        %v388 = vadd.f32 0.0, %v387
        %v389 = vpop.f32.mrb[0].mxu0
        %390 = vdwg.mxu0
        %v392 = vsel %vm314, %v308, 0
        %v394 = vsel %vm318, %v307, 0
        %396 = vmatprep.subr.mxu0 0.0
        %397 = vmatpush1.msra.mxu0 %v394
        %398 = vmatprep.subr.mxu0 0.0
        %399 = vmatpush1.msra.mxu0 0.0
        %400 = vmatprep.subr.mxu0 0.0
        %401 = vmatpush1.msra.mxu0 0.0
        %402 = vmatprep.subr.mxu0 0.0
        %403 = vmatpush1.msra.mxu0 0.0
        %404 = vmatprep.subr.mxu0 0.0
        %405 = vmatpush1.msra.mxu0 0.0
        %406 = vmatprep.subr.mxu0 0.0
        %407 = vmatpush1.msra.mxu0 0.0
        %408 = vmatprep.subr.mxu0 0.0
        %409 = vmatpush1.msra.mxu0 0.0
        %410 = vmatprep.subr.mxu0 0.0
        %411 = vmatpush1.msra.mxu0 0.0
        %412 = vmatprep.subr.mxu0 0.0
        %413 = vmatpush1.msra.mxu0 0.0
        %414 = vmatprep.subr.mxu0 0.0
        %415 = vmatpush1.msra.mxu0 0.0
        %416 = vmatprep.subr.mxu0 0.0
        %417 = vmatpush1.msra.mxu0 0.0
        %418 = vmatprep.subr.mxu0 0.0
        %419 = vmatpush1.msra.mxu0 0.0
        %420 = vmatprep.subr.mxu0 0.0
        %421 = vmatpush1.msra.mxu0 0.0
        %422 = vmatprep.subr.mxu0 0.0
        %423 = vmatpush1.msra.mxu0 0.0
        %424 = vmatprep.subr.mxu0 0.0
        %425 = vmatpush1.msra.mxu0 0.0
        %426 = vmatprep.subr.mxu0 0.0
        %427 = vmatpush1.msra.mxu0 0.0
        %428 = vmatprep.subr.mxu0 0.0
        %429 = vmatpush1.msra.mxu0 0.0
        %430 = vmatprep.subr.mxu0 0.0
        %431 = vmatpush1.msra.mxu0 0.0
        %432 = vmatprep.subr.mxu0 0.0
        %433 = vmatpush1.msra.mxu0 0.0
        %434 = vmatprep.subr.mxu0 0.0
        %435 = vmatpush1.msra.mxu0 0.0
        %436 = vmatprep.subr.mxu0 0.0
        %437 = vmatpush1.msra.mxu0 0.0
        %438 = vmatprep.subr.mxu0 0.0
        %439 = vmatpush1.msra.mxu0 0.0
        %440 = vmatprep.subr.mxu0 0.0
        %441 = vmatpush1.msra.mxu0 0.0
        %442 = vmatprep.subr.mxu0 0.0
        %443 = vmatpush1.msra.mxu0 0.0
        %444 = vmatprep.subr.mxu0 0.0
        %445 = vmatpush1.msra.mxu0 0.0
        %446 = vmatprep.subr.mxu0 0.0
        %447 = vmatpush1.msra.mxu0 0.0
        %448 = vmatprep.subr.mxu0 0.0
        %449 = vmatpush1.msra.mxu0 0.0
        %450 = vmatprep.subr.mxu0 0.0
        %451 = vmatpush1.msra.mxu0 0.0
        %452 = vmatprep.subr.mxu0 0.0
        %453 = vmatpush1.msra.mxu0 0.0
        %454 = vmatprep.subr.mxu0 0.0
        %455 = vmatpush1.msra.mxu0 0.0
        %456 = vmatprep.subr.mxu0 0.0
        %457 = vmatpush1.msra.mxu0 0.0
        %458 = vmatprep.subr.mxu0 0.0
        %459 = vmatpush1.msra.mxu0 0.0
        %460 = vmatprep.mubr.f32.mxu0 0.0
        %461 = vmatmul.mubr.f32.gmra.mrb[0].mxu0 %v392
        %v462 = vpop.f32.mrb[0].mxu0
        %v463 = vadd.f32 %v388, %v462
        %v464 = vpop.f32.mrb[0].mxu0
        %465 = vdwg.mxu0
        %s466 = scalar_lea.vmem %s2, 16
        %v467 = vld [vmem:[%s466] sm:$0xff]
        %468 = vrot.lane.b32.xlu0 %v307, 126
        %v469 = vpop.permute.xlu0 %468
        %v471 = vsel %vm314, %v467, 0
        %v473 = vsel %vm318, %v469, 0
        %475 = vmatprep.subr.mxu0 0.0
        %476 = vmatpush1.msra.mxu0 %v473
        %477 = vmatprep.subr.mxu0 0.0
        %478 = vmatpush1.msra.mxu0 0.0
        %479 = vmatprep.subr.mxu0 0.0
        %480 = vmatpush1.msra.mxu0 0.0
        %481 = vmatprep.subr.mxu0 0.0
        %482 = vmatpush1.msra.mxu0 0.0
        %483 = vmatprep.subr.mxu0 0.0
        %484 = vmatpush1.msra.mxu0 0.0
        %485 = vmatprep.subr.mxu0 0.0
        %486 = vmatpush1.msra.mxu0 0.0
        %487 = vmatprep.subr.mxu0 0.0
        %488 = vmatpush1.msra.mxu0 0.0
        %489 = vmatprep.subr.mxu0 0.0
        %490 = vmatpush1.msra.mxu0 0.0
        %491 = vmatprep.subr.mxu0 0.0
        %492 = vmatpush1.msra.mxu0 0.0
        %493 = vmatprep.subr.mxu0 0.0
        %494 = vmatpush1.msra.mxu0 0.0
        %495 = vmatprep.subr.mxu0 0.0
        %496 = vmatpush1.msra.mxu0 0.0
        %497 = vmatprep.subr.mxu0 0.0
        %498 = vmatpush1.msra.mxu0 0.0
        %499 = vmatprep.subr.mxu0 0.0
        %500 = vmatpush1.msra.mxu0 0.0
        %501 = vmatprep.subr.mxu0 0.0
        %502 = vmatpush1.msra.mxu0 0.0
        %503 = vmatprep.subr.mxu0 0.0
        %504 = vmatpush1.msra.mxu0 0.0
        %505 = vmatprep.subr.mxu0 0.0
        %506 = vmatpush1.msra.mxu0 0.0
        %507 = vmatprep.subr.mxu0 0.0
        %508 = vmatpush1.msra.mxu0 0.0
        %509 = vmatprep.subr.mxu0 0.0
        %510 = vmatpush1.msra.mxu0 0.0
        %511 = vmatprep.subr.mxu0 0.0
        %512 = vmatpush1.msra.mxu0 0.0
        %513 = vmatprep.subr.mxu0 0.0
        %514 = vmatpush1.msra.mxu0 0.0
        %515 = vmatprep.subr.mxu0 0.0
        %516 = vmatpush1.msra.mxu0 0.0
        %517 = vmatprep.subr.mxu0 0.0
        %518 = vmatpush1.msra.mxu0 0.0
        %519 = vmatprep.subr.mxu0 0.0
        %520 = vmatpush1.msra.mxu0 0.0
        %521 = vmatprep.subr.mxu0 0.0
        %522 = vmatpush1.msra.mxu0 0.0
        %523 = vmatprep.subr.mxu0 0.0
        %524 = vmatpush1.msra.mxu0 0.0
        %525 = vmatprep.subr.mxu0 0.0
        %526 = vmatpush1.msra.mxu0 0.0
        %527 = vmatprep.subr.mxu0 0.0
        %528 = vmatpush1.msra.mxu0 0.0
        %529 = vmatprep.subr.mxu0 0.0
        %530 = vmatpush1.msra.mxu0 0.0
        %531 = vmatprep.subr.mxu0 0.0
        %532 = vmatpush1.msra.mxu0 0.0
        %533 = vmatprep.subr.mxu0 0.0
        %534 = vmatpush1.msra.mxu0 0.0
        %535 = vmatprep.subr.mxu0 0.0
        %536 = vmatpush1.msra.mxu0 0.0
        %537 = vmatprep.subr.mxu0 0.0
        %538 = vmatpush1.msra.mxu0 0.0
        %539 = vmatprep.mubr.f32.mxu0 0.0
        %540 = vmatmul.mubr.f32.gmra.mrb[0].mxu0 %v471
        %v541 = vpop.f32.mrb[0].mxu0
        %v542 = vadd.f32 0.0, %v541
        %v543 = vpop.f32.mrb[0].mxu0
        %544 = vdwg.mxu0
        %v545 = vadd.f32 %v463, %v542
        %v546 = vld [vmem:[%s3] sm:$0xff]
        %548 = vset.pattern.permute.xlu0 0
        %549 = vperm.xlu0 %548, %v546
        %v550 = vpop.permute.xlu0 %549
        %v552 = vadd.f32 %v545, %v550
        %v553 = vmax.f32 %v552, 0.0
        %v554 = vsel %vm306, %v553, 0.0
        %v555 = vrot.slane %v554, 4
        %v556 = vadd.f32 %v554, %v555
        %v557 = vrot.slane %v556, 2
        %v558 = vadd.f32 %v556, %v557
        %v559 = vrot.slane %v558, 1
        %v560 = vadd.f32 %v558, %v559
        %v561 = vmul.f32 %v553, %v553
        %v562 = vsel %vm306, %v561, 0.0
        %v563 = vrot.slane %v562, 4
        %v564 = vadd.f32 %v562, %v563
        %v565 = vrot.slane %v564, 2
        %v566 = vadd.f32 %v564, %v565
        %v567 = vrot.slane %v566, 1
        %v568 = vadd.f32 %v566, %v567
        %v569 = vmul.f32 %v560, 0.125
        %v570 = vmul.f32 %v568, 0.125
        %v571 = vmul.f32 %v569, %v569
        %v572 = vsub.f32 %v570, %v571
        %v573 = vmax.f32 %v572, 0.0
        %v574 = vadd.f32 %v573, 1e-05
        %v575 = vrsqrt.pop %v574
        %v576 = vsub.f32 %v553, %v569
        %v577 = vmul.f32 %v576, %v575
        %v578 = vld [vmem:[%s4] sm:$0xff]
        %580 = vset.pattern.permute.xlu0 0
        %581 = vperm.xlu0 %580, %v578
        %v582 = vpop.permute.xlu0 %581
        %v584 = vmul.f32 %v577, %v582
        %v585 = vld [vmem:[%s5] sm:$0xff]
        %587 = vset.pattern.permute.xlu0 0
        %588 = vperm.xlu0 %587, %v585
        %v589 = vpop.permute.xlu0 %588
        %v591 = vadd.f32 %v584, %v589
        %592 = vst.msk [vmem:[%s285] sm:$0xff] %vm306, %v591
        %s593 = sand.u32 %s182, 1
        %s594 = scalar_lea.sflag [#allocation3], %s593
        %s595 = sand.u32 %s182, 1
        %s596 = smul.addr %s595, 8
        %s597 = scalar_lea.vmem [#allocation2], %s596
        // Predicated region
        $region45: #{tpu_custom_call.1} parent=43 // pred_check
          %p598 = pneg %p192
        $region46: #{tpu_custom_call.1} parent=43 // pred_check_branch
          %600 = sbr.rel (%p598) target = $region48
        $region47: #{tpu_custom_call.1} parent=43 // pred_region
          %s602 = ssub.s32 128, 128
          %603 = vsyncadd %s594, %s602
          %s604 = sadd.s32 %s25, %s24
          %s605 = smul.addr %s604, 128
          %s606 = scalar_lea.hbm %s6, %s605
          %s608 = sshll.u32 %s597, 4
          %s609 = int_to_ptr.vmem [resolvable:$true] %s608
          %611 = dma.vmem_to_hbm [thread:$0]  %s609, 128, %s606, %s594
        $region48: #{tpu_custom_call.1} parent=43 // pred_fallthru
          _
      $region44: #{tpu_custom_call.1} parent=5 // pred_fallthru
        _
      %p612 = scmp.le.s32.totalorder 2, %s15
      // Predicated region
      $region49: #{tpu_custom_call.1} parent=5 // pred_check
        %p613 = pneg %p612
      $region50: #{tpu_custom_call.1} parent=5 // pred_check_branch
        %615 = sbr.rel (%p613) target = $region52
      $region51: #{tpu_custom_call.1} parent=5 // pred_region
        %s616 = ssub.s32 %s15, 2
        // Predicated region
        $region53: #{tpu_custom_call.1} parent=51 // pred_check
          %p617 = pneg %p198
        $region54: #{tpu_custom_call.1} parent=51 // pred_check_branch
          %619 = sbr.rel (%p617) target = $region56
        $region55: #{tpu_custom_call.1} parent=51 // pred_region
          %s620 = sand.u32 %s183, 1
          %s621 = scalar_lea.sflag [#allocation3], %s620
          %s622 = sand.u32 %s183, 1
          %s623 = smul.addr %s622, 8
          %s624 = scalar_lea.vmem [#allocation2], %s623
          %625 = dma.done %s621, 128
        $region56: #{tpu_custom_call.1} parent=51 // pred_fallthru
          _
      $region52: #{tpu_custom_call.1} parent=5 // pred_fallthru
        _
    $region6: #{tpu_custom_call.1} parent=1 // loop_footer
      %s19 = sadd.s32 1, %s15
    $region7: #{tpu_custom_call.1} parent=1 // loop_footer_branch
      %14 = sbr.rel target = $region3
    $region8: #{tpu_custom_call.1} parent=1 // loop_exit
      _
    %626 = vsyncpa [#allocation3], 1
    %s627 = scalar_lea.sflag [#allocation3], 1
    %628 = vsyncpa %s627, 1

</llo_original>
